<compile_context>
chip_gen: v6e
topology: v6e:2x2x1
jax: 0.10.0
libtpu: 0.0.40
codegen_flags: <defaults>
</compile_context>

<pallas_src>
import functools

import jax
import jax.numpy as jnp
from jax.experimental import pallas as pl
from jax.experimental.pallas import tpu as pltpu

_LANE = 128
_MASK_PEN = 1e10    # PyTorch: pi[avail_a_n == 0] = -1e10
_PAD_NEG = -1e30    # baked into padded bias lanes so padded logits vanish in softmax

_CPARAMS = pltpu.CompilerParams(dimension_semantics=("parallel",))


def _round_up(x, m):
    return (x + m - 1) // m * m


def _batch_tiling(b, compute_dtype=jnp.float32):
    """Batch tile: multiple of the packed sublane count, capped at 1024, chosen so
    large batches always yield >= 2 grid steps (v7x two-TC sharding)."""
    sub = 16 if compute_dtype == jnp.bfloat16 else 8
    tb = min(1024, _round_up(max(pl.cdiv(b, 2), 1), sub))
    return tb, pl.cdiv(b, tb)


# ----------------------------------------------------------------------------
# In-kernel helpers
# ----------------------------------------------------------------------------
def _act(z, use_relu):
    # args.use_relu selects [Tanh, ReLU]; both supported, ReLU is the default.
    return jnp.maximum(z, 0.0) if use_relu else jnp.tanh(z)


def _matmul(a, w, compute_dtype):
    # bf16 operands + f32 accumulation when compute_dtype == bfloat16 (v6e/v7x).
    # Weights shipped pre-cast to compute_dtype make the astype a no-op.
    return jnp.dot(a.astype(compute_dtype), w.astype(compute_dtype),
                   preferred_element_type=jnp.float32)


def _softmax_lanes(logits, approx):
    m = jnp.max(logits, axis=-1, keepdims=True)
    e = jnp.exp(logits - m)
    s = jnp.sum(e, axis=-1, keepdims=True)
    if approx:
        return e * pl.reciprocal(s, approx=True)
    return e / s


def _action_mask(avail_ref, scr_ref):
    """(tb, A) 0/1 avail (any dtype) -> (tb, Ap) additive f32 mask:
    0 where available, -1e10 where not, 0 on padded lanes (those lanes are already
    dead via the -1e30 baked into the padded bias)."""
    mask = (avail_ref[...].astype(jnp.float32) - 1.0) * _MASK_PEN
    a = mask.shape[-1]
    if a == scr_ref.shape[-1]:
        return mask
    scr_ref[...] = jnp.zeros_like(scr_ref)
    scr_ref[:, :a] = mask          # masked sub-lane store; padded lanes stay 0
    return scr_ref[...]


# ----------------------------------------------------------------------------
# Kernel 1: skip is None  ->  fc1 -> act -> fc2 -> act -> fc_skip -> softmax
# ----------------------------------------------------------------------------
def _skip_branch_kernel(x_ref, w1_ref, b1_ref, w2_ref, b2_ref, wsk_ref, bsk_ref,
                        prob_ref, h_ref, *, use_relu, compute_dtype, approx_softmax):
    a1 = _act(_matmul(x_ref[...], w1_ref[...], compute_dtype) + b1_ref[...], use_relu)
    a2 = _act(_matmul(a1, w2_ref[...], compute_dtype) + b2_ref[...], use_relu)
    logits = _matmul(a2, wsk_ref[...], compute_dtype) + bsk_ref[...]
    prob_ref[...] = _softmax_lanes(logits, approx_softmax)
    h_ref[...] = a2.astype(h_ref.dtype)


# ----------------------------------------------------------------------------
# Kernel 2: skip given  ->  fc_pi(cat(x, skip)) -> mask -> softmax
# Single fused K = Hp+Sp matmul (128-aligned in-kernel concat).
# ----------------------------------------------------------------------------
def _pi_branch_kernel(x_ref, skip_ref, avail_ref, wpi_ref, bpi_ref,
                      prob_ref, mask_scr, *, compute_dtype, approx_softmax):
    xs = jnp.concatenate([x_ref[...], skip_ref[...]], axis=-1)   # (tb, Hp+Sp)
    pi = _matmul(xs, wpi_ref[...], compute_dtype) + bpi_ref[...]
    pi = pi + _action_mask(avail_ref, mask_scr)
    prob_ref[...] = _softmax_lanes(pi, approx_softmax)


# ----------------------------------------------------------------------------
# Fused kernel: both branches back-to-back in one pallas_call.
# x / prob_skip never leave VMEM.  (skip fed to fc_pi is the dense prob_skip;
# if the caller samples a one-hot skip in between, use the two separate kernels.)
# ----------------------------------------------------------------------------
def _fused_kernel(x_ref, avail_ref,
                  w1_ref, b1_ref, w2_ref, b2_ref, wsk_ref, bsk_ref,
                  wpi_ref, bpi_ref,
                  prob_pi_ref, prob_skip_ref, h_ref, mask_scr,
                  *, use_relu, compute_dtype, approx_softmax):
    a1 = _act(_matmul(x_ref[...], w1_ref[...], compute_dtype) + b1_ref[...], use_relu)
    a2 = _act(_matmul(a1, w2_ref[...], compute_dtype) + b2_ref[...], use_relu)
    logits = _matmul(a2, wsk_ref[...], compute_dtype) + bsk_ref[...]
    prob_skip = _softmax_lanes(logits, approx_softmax)

    xs = jnp.concatenate([a2, prob_skip], axis=-1)               # K = Hp + Sp (=256)
    pi = _matmul(xs, wpi_ref[...], compute_dtype) + bpi_ref[...]
    pi = pi + _action_mask(avail_ref, mask_scr)

    prob_pi_ref[...] = _softmax_lanes(pi, approx_softmax)
    prob_skip_ref[...] = prob_skip
    h_ref[...] = a2.astype(h_ref.dtype)


# ----------------------------------------------------------------------------
# Host-side helpers
# ----------------------------------------------------------------------------
def _full_spec(arr):
    # Constant index_map -> weight tile stays VMEM-resident across grid steps.
    return pl.BlockSpec(arr.shape, lambda i: (0, 0))


def _row_spec(tb, cols):
    return pl.BlockSpec((tb, cols), lambda i: (i, 0))


def _pad_lanes(a, cols):
    a = a.astype(jnp.float32)
    if a.shape[1] == cols:
        return a
    return jnp.pad(a, ((0, 0), (0, cols - a.shape[1])))


# ----------------------------------------------------------------------------
# Public wrappers
# ----------------------------------------------------------------------------
def actor_mlp_forward(actor_input, avail_a_n, skip, params, *, use_relu=True,
                      compute_dtype=jnp.float32, hidden_dtype=jnp.float32,
                      approx_softmax=False, unpad=True):
    """Mirrors Actor_MLP.forward.
    skip is None  -> returns (prob over skip_dim, hidden x)
    skip provided -> returns prob over action_dim (actor_input is the hidden x).
    With unpad=False the lane-padded (x128) outputs are returned directly so the next
    consumer avoids post-kernel slice copies (padded prob/hidden lanes are exact 0)."""
    _, H, S, A = params["dims"]
    Hp = params["w2"].shape[1]
    Sp = params["w_skip"].shape[1]
    Ap = params["b_pi"].shape[1]
    B = actor_input.shape[0]
    tb, nb = _batch_tiling(B, compute_dtype)

    if skip is None:
        x = actor_input.astype(jnp.float32)
        din = x.shape[1]
        kernel = functools.partial(_skip_branch_kernel, use_relu=use_relu,
                                   compute_dtype=compute_dtype,
                                   approx_softmax=approx_softmax)
        prob_p, h_p = pl.pallas_call(
            kernel,
            grid=(nb,),
            in_specs=[
                _row_spec(tb, din),
                _full_spec(params["w1"]), _full_spec(params["b1"]),
                _full_spec(params["w2"]), _full_spec(params["b2"]),
                _full_spec(params["w_skip"]), _full_spec(params["b_skip"]),
            ],
            out_specs=(_row_spec(tb, Sp), _row_spec(tb, Hp)),
            out_shape=(jax.ShapeDtypeStruct((B, Sp), jnp.float32),
                       jax.ShapeDtypeStruct((B, Hp), hidden_dtype)),
            compiler_params=_CPARAMS,
        )(x, params["w1"], params["b1"], params["w2"], params["b2"],
          params["w_skip"], params["b_skip"])
        if unpad:
            return prob_p[:, :S], h_p[:, :H]
        return prob_p, h_p

    # skip given: actor_input is the hidden x (fc_pi input).  Lane-pad only if the
    # caller passed narrow tensors; the optimized flow feeds the padded branch-1
    # outputs straight through (no host copies).
    xh = _pad_lanes(actor_input, Hp)
    sk = _pad_lanes(skip, Sp)
    kernel = functools.partial(_pi_branch_kernel, compute_dtype=compute_dtype,
                               approx_softmax=approx_softmax)
    prob_p = pl.pallas_call(
        kernel,
        grid=(nb,),
        in_specs=[
            _row_spec(tb, Hp), _row_spec(tb, Sp), _row_spec(tb, avail_a_n.shape[1]),
            _full_spec(params["w_pi"]), _full_spec(params["b_pi"]),
        ],
        out_specs=_row_spec(tb, Ap),
        out_shape=jax.ShapeDtypeStruct((B, Ap), jnp.float32),
        scratch_shapes=[pltpu.VMEM((tb, Ap), jnp.float32)],
        compiler_params=_CPARAMS,
    )(xh, sk, avail_a_n, params["w_pi"], params["b_pi"])
    if unpad:
        return prob_p[:, :A]
    return prob_p


def actor_mlp_forward_fused(actor_input, avail_a_n, params, *, use_relu=True,
                            compute_dtype=jnp.float32, hidden_dtype=jnp.float32,
                            approx_softmax=False, unpad=True):
    """Both forward branches in ONE kernel (skip := dense prob_skip; only valid when a
    soft skip is intended — otherwise use the two separate actor_mlp_forward calls).
    Returns (prob_pi, prob_skip, x)."""
    _, H, S, A = params["dims"]
    Hp = params["w2"].shape[1]
    Sp = params["w_skip"].shape[1]
    Ap = params["b_pi"].shape[1]
    B = actor_input.shape[0]
    tb, nb = _batch_tiling(B, compute_dtype)
    x = actor_input.astype(jnp.float32)
    din = x.shape[1]

    kernel = functools.partial(_fused_kernel, use_relu=use_relu,
                               compute_dtype=compute_dtype,
                               approx_softmax=approx_softmax)
    prob_pi_p, prob_skip_p, h_p = pl.pallas_call(
        kernel,
        grid=(nb,),
        in_specs=[
            _row_spec(tb, din), _row_spec(tb, avail_a_n.shape[1]),
            _full_spec(params["w1"]), _full_spec(params["b1"]),
            _full_spec(params["w2"]), _full_spec(params["b2"]),
            _full_spec(params["w_skip"]), _full_spec(params["b_skip"]),
            _full_spec(params["w_pi"]), _full_spec(params["b_pi"]),
        ],
        out_specs=(_row_spec(tb, Ap), _row_spec(tb, Sp), _row_spec(tb, Hp)),
        out_shape=(jax.ShapeDtypeStruct((B, Ap), jnp.float32),
                   jax.ShapeDtypeStruct((B, Sp), jnp.float32),
                   jax.ShapeDtypeStruct((B, Hp), hidden_dtype)),
        scratch_shapes=[pltpu.VMEM((tb, Ap), jnp.float32)],
        compiler_params=_CPARAMS,
    )(x, avail_a_n, params["w1"], params["b1"], params["w2"], params["b2"],
      params["w_skip"], params["b_skip"], params["w_pi"], params["b_pi"])
    if unpad:
        return prob_pi_p[:, :A], prob_skip_p[:, :S], h_p[:, :H]
    return prob_pi_p, prob_skip_p, h_p


# ----------------------------------------------------------------------------
# Parameter init: orthogonal weights (gain 1.0 / 0.01), zero biases, mirroring
# orthogonal_init() in the PyTorch module.  Weights stored transposed [in, out],
# lane-padded to multiples of 128, fc_pi fused into one (Hp+Sp, Ap) matrix, and
# optionally pre-cast to bf16 (weight_dtype) so the kernel never re-casts per step.
# Biases stay f32; padded bias lanes of the softmax heads carry -1e30.
# ----------------------------------------------------------------------------
def _pad2d(a, rows, cols, fill=0.0, dtype=jnp.float32):
    out = jnp.full((rows, cols), fill, jnp.float32)
    out = out.at[: a.shape[0], : a.shape[1]].set(a.astype(jnp.float32))
    return out.astype(dtype)


def init_params(key, actor_input_dim, mlp_hidden_dim, skip_dim, action_dim,
                weight_dtype=jnp.float32):
    H, S, A, Din = mlp_hidden_dim, skip_dim, action_dim, actor_input_dim
    ks = jax.random.split(key, 4)
    ortho = jax.nn.initializers.orthogonal

    w1 = ortho(1.0)(ks[0], (H, Din), jnp.float32).T          # [Din, H]
    w2 = ortho(1.0)(ks[1], (H, H), jnp.float32).T            # [H, H]
    w_skip = ortho(0.01)(ks[2], (S, H), jnp.float32).T       # [H, S]
    w_pi = ortho(0.01)(ks[3], (A, H + S), jnp.float32).T     # [H+S, A]
    b1 = jnp.zeros((1, H), jnp.float32)
    b2 = jnp.zeros((1, H), jnp.float32)
    b_skip = jnp.zeros((1, S), jnp.float32)
    b_pi = jnp.zeros((1, A), jnp.float32)

    raw = dict(w1=w1, b1=b1, w2=w2, b2=b2, w_skip=w_skip, b_skip=b_skip,
               w_pi=w_pi, b_pi=b_pi)

    Hp, Sp, Ap = (_round_up(d, _LANE) for d in (H, S, A))
    # fused fc_pi weight: rows [0:H] = x part, rows [Hp:Hp+S] = skip part, rest 0
    w_pi_cat = jnp.zeros((Hp + Sp, Ap), jnp.float32)
    w_pi_cat = w_pi_cat.at[:H, :A].set(w_pi[:H, :])
    w_pi_cat = w_pi_cat.at[Hp:Hp + S, :A].set(w_pi[H:, :])

    padded = dict(
        w1=_pad2d(w1, Din, Hp, dtype=weight_dtype),
        b1=_pad2d(b1, 1, Hp),
        w2=_pad2d(w2, Hp, Hp, dtype=weight_dtype),
        b2=_pad2d(b2, 1, Hp),
        w_skip=_pad2d(w_skip, Hp, Sp, dtype=weight_dtype),
        b_skip=_pad2d(b_skip, 1, Sp, fill=_PAD_NEG),     # kill padded softmax lanes
        w_pi=w_pi_cat.astype(weight_dtype),
        b_pi=_pad2d(b_pi, 1, Ap, fill=_PAD_NEG),         # kill padded softmax lanes
        dims=(Din, H, S, A),
    )
    return padded, raw


# ----------------------------------------------------------------------------
# Pure-JAX reference (unpadded) for correctness checks.
# ----------------------------------------------------------------------------
def _ref_skip_branch(x, p, use_relu=True):
    act = (lambda z: jnp.maximum(z, 0.0)) if use_relu else jnp.tanh
    a1 = act(x @ p["w1"] + p["b1"])
    a2 = act(a1 @ p["w2"] + p["b2"])
    s = a2 @ p["w_skip"] + p["b_skip"]
    return jax.nn.softmax(s, axis=-1), a2


def _ref_pi_branch(x, avail, skip, p):
    pi = jnp.concatenate([x, skip], axis=-1) @ p["w_pi"] + p["b_pi"]
    pi = jnp.where(avail == 0, -_MASK_PEN, pi)
    return jax.nn.softmax(pi, axis=-1)


if __name__ == "__main__":
    # Small shapes consistent with a SMAC actor.
    B = 6                  # num_agents * num_envs (deliberately not a multiple of 8)
    actor_input_dim = 48
    mlp_hidden_dim = 64
    skip_dim = 8
    action_dim = 14

    key = jax.random.PRNGKey(0)
    kp, kx, ka = jax.random.split(key, 3)
    params, raw = init_params(kp, actor_input_dim, mlp_hidden_dim, skip_dim, action_dim)

    actor_input = jax.random.normal(kx, (B, actor_input_dim), jnp.float32)
    avail_a_n = (jax.random.uniform(ka, (B, action_dim)) > 0.3).astype(jnp.int32)
    avail_a_n = avail_a_n.at[:, 0].set(1)  # ensure at least one available action

    ref_prob_skip, ref_x = _ref_skip_branch(actor_input, raw)
    ref_prob_pi = _ref_pi_branch(ref_x, avail_a_n, ref_prob_skip, raw)

    H, S, A = mlp_hidden_dim, skip_dim, action_dim

    # --- branch 1: skip is None.  Keep lane-padded outputs (no slice copies). ---
    prob_skip_p, x_p = actor_mlp_forward(actor_input, avail_a_n, None, params,
                                         unpad=False)
    jax.block_until_ready((prob_skip_p, x_p))
    assert jnp.allclose(x_p[:, :H], ref_x, atol=1e-5), "hidden mismatch"
    assert jnp.allclose(prob_skip_p[:, :S], ref_prob_skip, atol=1e-5), "skip prob mismatch"
    assert jnp.allclose(prob_skip_p[:, S:], 0.0), "padded skip lanes not zero"

    # --- branch 2: skip given, fed directly with the padded branch-1 outputs ---
    prob_pi = actor_mlp_forward(x_p, avail_a_n, prob_skip_p, params)
    jax.block_until_ready(prob_pi)
    assert jnp.allclose(prob_pi, ref_prob_pi, atol=1e-5), "pi prob mismatch"

    # --- branch 2 with narrow external inputs (host lane-pad fallback path) ---
    prob_pi_n = actor_mlp_forward(ref_x, avail_a_n, ref_prob_skip, params)
    jax.block_until_ready(prob_pi_n)
    assert jnp.allclose(prob_pi_n, ref_prob_pi, atol=1e-5), "pi prob (narrow) mismatch"

    # --- fused single-kernel path (soft skip := prob_skip, VMEM-resident) ---
    prob_pi_f, prob_skip_f, x_f = actor_mlp_forward_fused(actor_input, avail_a_n, params)
    jax.block_until_ready((prob_pi_f, prob_skip_f, x_f))
    assert jnp.allclose(x_f, ref_x, atol=1e-5), "fused hidden mismatch"
    assert jnp.allclose(prob_skip_f, ref_prob_skip, atol=1e-5), "fused skip prob mismatch"
    assert jnp.allclose(prob_pi_f, ref_prob_pi, atol=1e-5), "fused pi prob mismatch"

    # --- bf16 weights + bf16 MXU operands + bf16 hidden writeback (v6e/v7x lever) ---
    params_bf16, _ = init_params(kp, actor_input_dim, mlp_hidden_dim, skip_dim,
                                 action_dim, weight_dtype=jnp.bfloat16)
    pf, sf, xf = actor_mlp_forward_fused(actor_input, avail_a_n, params_bf16,
                                         compute_dtype=jnp.bfloat16,
                                         hidden_dtype=jnp.bfloat16)
    jax.block_until_ready((pf, sf, xf))
    assert jnp.all(jnp.isfinite(pf)), "bf16 path produced non-finite probs"
    assert jnp.allclose(jnp.sum(pf, axis=-1), 1.0, atol=1e-3), "bf16 probs not normalized"
    assert jnp.allclose(pf, ref_prob_pi, atol=1e-1), "bf16 probs far from f32 reference"

    print("KERNEL_OK")
</pallas_src>

<mosaic_0001>
module attributes {stable_mosaic.version = 11 : i64} {
  func.func @_skip_branch_kernel(%arg0: i32, %arg1: memref<8x48xf32, #tpu.memory_space<vmem>>, %arg2: memref<48x128xf32, #tpu.memory_space<vmem>>, %arg3: memref<1x128xf32, #tpu.memory_space<vmem>>, %arg4: memref<128x128xf32, #tpu.memory_space<vmem>>, %arg5: memref<1x128xf32, #tpu.memory_space<vmem>>, %arg6: memref<128x128xf32, #tpu.memory_space<vmem>>, %arg7: memref<1x128xf32, #tpu.memory_space<vmem>>, %arg8: memref<8x128xf32, #tpu.memory_space<vmem>>, %arg9: memref<8x128xf32, #tpu.memory_space<vmem>>) attributes {dimension_semantics = [#tpu.dimension_semantics<parallel>], iteration_bounds = array<i64: 1>, scalar_prefetch = 0 : i64, scratch_operands = 0 : i64, tpu.core_type = #tpu.core_type<tc>, window_params = [{transform_indices = @transform_0, window_bounds = array<i64: 8, 48>}, {pipeline_mode = #tpu.pipeline_mode<synchronous>, transform_indices = @transform_1, window_bounds = array<i64: 48, 128>}, {pipeline_mode = #tpu.pipeline_mode<synchronous>, transform_indices = @transform_2, window_bounds = array<i64: 1, 128>}, {pipeline_mode = #tpu.pipeline_mode<synchronous>, transform_indices = @transform_3, window_bounds = array<i64: 128, 128>}, {pipeline_mode = #tpu.pipeline_mode<synchronous>, transform_indices = @transform_4, window_bounds = array<i64: 1, 128>}, {pipeline_mode = #tpu.pipeline_mode<synchronous>, transform_indices = @transform_5, window_bounds = array<i64: 128, 128>}, {pipeline_mode = #tpu.pipeline_mode<synchronous>, transform_indices = @transform_6, window_bounds = array<i64: 1, 128>}, {transform_indices = @transform_7, window_bounds = array<i64: 8, 128>}, {transform_indices = @transform_8, window_bounds = array<i64: 8, 128>}]} {
    %c0 = arith.constant 0 : index
    %c0_0 = arith.constant 0 : index
    %0 = vector.load %arg1[%c0, %c0_0] : memref<8x48xf32, #tpu.memory_space<vmem>>, vector<8x48xf32>
    %c0_1 = arith.constant 0 : index
    %c0_2 = arith.constant 0 : index
    %1 = vector.load %arg2[%c0_1, %c0_2] : memref<48x128xf32, #tpu.memory_space<vmem>>, vector<48x128xf32>
    %cst = arith.constant dense<0.000000e+00> : vector<8x128xf32>
    %2 = tpu.matmul %0, %1, %cst {dimension_numbers = #tpu.dot_dimension_numbers<[1], [0], [0], [1], [0, 0, 1, 1], [], []>} : vector<8x48xf32>, vector<48x128xf32>, vector<8x128xf32> -> vector<8x128xf32>
    %c0_3 = arith.constant 0 : index
    %c0_4 = arith.constant 0 : index
    %3 = vector.load %arg3[%c0_3, %c0_4] : memref<1x128xf32, #tpu.memory_space<vmem>>, vector<1x128xf32>
    %4 = vector.broadcast %3 : vector<1x128xf32> to vector<8x128xf32>
    %5 = arith.addf %2, %4 : vector<8x128xf32>
    %cst_5 = arith.constant 0.000000e+00 : f32
    %6 = vector.broadcast %cst_5 : f32 to vector<8x128xf32>
    %7 = arith.maximumf %5, %6 : vector<8x128xf32>
    %c0_6 = arith.constant 0 : index
    %c0_7 = arith.constant 0 : index
    %8 = vector.load %arg4[%c0_6, %c0_7] : memref<128x128xf32, #tpu.memory_space<vmem>>, vector<128x128xf32>
    %cst_8 = arith.constant dense<0.000000e+00> : vector<8x128xf32>
    %9 = tpu.matmul %7, %8, %cst_8 {dimension_numbers = #tpu.dot_dimension_numbers<[1], [0], [0], [1], [0, 0, 1, 1], [], []>} : vector<8x128xf32>, vector<128x128xf32>, vector<8x128xf32> -> vector<8x128xf32>
    %c0_9 = arith.constant 0 : index
    %c0_10 = arith.constant 0 : index
    %10 = vector.load %arg5[%c0_9, %c0_10] : memref<1x128xf32, #tpu.memory_space<vmem>>, vector<1x128xf32>
    %11 = vector.broadcast %10 : vector<1x128xf32> to vector<8x128xf32>
    %12 = arith.addf %9, %11 : vector<8x128xf32>
    %cst_11 = arith.constant 0.000000e+00 : f32
    %13 = vector.broadcast %cst_11 : f32 to vector<8x128xf32>
    %14 = arith.maximumf %12, %13 : vector<8x128xf32>
    %c0_12 = arith.constant 0 : index
    %c0_13 = arith.constant 0 : index
    %15 = vector.load %arg6[%c0_12, %c0_13] : memref<128x128xf32, #tpu.memory_space<vmem>>, vector<128x128xf32>
    %cst_14 = arith.constant dense<0.000000e+00> : vector<8x128xf32>
    %16 = tpu.matmul %14, %15, %cst_14 {dimension_numbers = #tpu.dot_dimension_numbers<[1], [0], [0], [1], [0, 0, 1, 1], [], []>} : vector<8x128xf32>, vector<128x128xf32>, vector<8x128xf32> -> vector<8x128xf32>
    %c0_15 = arith.constant 0 : index
    %c0_16 = arith.constant 0 : index
    %17 = vector.load %arg7[%c0_15, %c0_16] : memref<1x128xf32, #tpu.memory_space<vmem>>, vector<1x128xf32>
    %18 = vector.broadcast %17 : vector<1x128xf32> to vector<8x128xf32>
    %19 = arith.addf %16, %18 : vector<8x128xf32>
    %cst_17 = arith.constant dense<0xFF800000> : vector<8xf32>
    %20 = vector.multi_reduction <maximumf>, %19, %cst_17 [1] : vector<8x128xf32> to vector<8xf32>
    %21 = vector.shape_cast %20 : vector<8xf32> to vector<8x1xf32>
    %22 = vector.broadcast %21 : vector<8x1xf32> to vector<8x128xf32>
    %23 = arith.subf %19, %22 : vector<8x128xf32>
    %24 = math.exp %23 : vector<8x128xf32>
    %cst_18 = arith.constant dense<0.000000e+00> : vector<8xf32>
    %25 = vector.multi_reduction <add>, %24, %cst_18 [1] : vector<8x128xf32> to vector<8xf32>
    %26 = vector.shape_cast %25 : vector<8xf32> to vector<8x1xf32>
    %27 = vector.broadcast %26 : vector<8x1xf32> to vector<8x128xf32>
    %28 = arith.divf %24, %27 : vector<8x128xf32>
    %c0_19 = arith.constant 0 : index
    %c0_20 = arith.constant 0 : index
    %29 = vector.load %arg8[%c0_19, %c0_20] : memref<8x128xf32, #tpu.memory_space<vmem>>, vector<8x128xf32>
    tpu.vector_store %arg8[%c0_19, %c0_20], %28 {strides = array<i32>} : memref<8x128xf32, #tpu.memory_space<vmem>>, vector<8x128xf32>,
    %c0_21 = arith.constant 0 : index
    %c0_22 = arith.constant 0 : index
    %30 = vector.load %arg9[%c0_21, %c0_22] : memref<8x128xf32, #tpu.memory_space<vmem>>, vector<8x128xf32>
    tpu.vector_store %arg9[%c0_21, %c0_22], %14 {strides = array<i32>} : memref<8x128xf32, #tpu.memory_space<vmem>>, vector<8x128xf32>,
    return
  }
  func.func @transform_0(%arg0: i32) -> (i32, i32) {
    %c0_i32 = arith.constant 0 : i32
    %c0_i32_0 = arith.constant 0 : i32
    return %arg0, %c0_i32 : i32, i32
  }
  func.func @transform_1(%arg0: i32) -> (i32, i32) {
    %c0_i32 = arith.constant 0 : i32
    %c0_i32_0 = arith.constant 0 : i32
    %c0_i32_1 = arith.constant 0 : i32
    return %c0_i32, %c0_i32_0 : i32, i32
  }
  func.func @transform_2(%arg0: i32) -> (i32, i32) {
    %c0_i32 = arith.constant 0 : i32
    %c0_i32_0 = arith.constant 0 : i32
    %c0_i32_1 = arith.constant 0 : i32
    return %c0_i32, %c0_i32_0 : i32, i32
  }
  func.func @transform_3(%arg0: i32) -> (i32, i32) {
    %c0_i32 = arith.constant 0 : i32
    %c0_i32_0 = arith.constant 0 : i32
    %c0_i32_1 = arith.constant 0 : i32
    return %c0_i32, %c0_i32_0 : i32, i32
  }
  func.func @transform_4(%arg0: i32) -> (i32, i32) {
    %c0_i32 = arith.constant 0 : i32
    %c0_i32_0 = arith.constant 0 : i32
    %c0_i32_1 = arith.constant 0 : i32
    return %c0_i32, %c0_i32_0 : i32, i32
  }
  func.func @transform_5(%arg0: i32) -> (i32, i32) {
    %c0_i32 = arith.constant 0 : i32
    %c0_i32_0 = arith.constant 0 : i32
    %c0_i32_1 = arith.constant 0 : i32
    return %c0_i32, %c0_i32_0 : i32, i32
  }
  func.func @transform_6(%arg0: i32) -> (i32, i32) {
    %c0_i32 = arith.constant 0 : i32
    %c0_i32_0 = arith.constant 0 : i32
    %c0_i32_1 = arith.constant 0 : i32
    return %c0_i32, %c0_i32_0 : i32, i32
  }
  func.func @transform_7(%arg0: i32) -> (i32, i32) {
    %c0_i32 = arith.constant 0 : i32
    %c0_i32_0 = arith.constant 0 : i32
    return %arg0, %c0_i32 : i32, i32
  }
  func.func @transform_8(%arg0: i32) -> (i32, i32) {
    %c0_i32 = arith.constant 0 : i32
    %c0_i32_0 = arith.constant 0 : i32
    return %arg0, %c0_i32 : i32, i32
  }
}

</mosaic_0001>

<llo_original>
// kernel: tpu_custom_call.1
$region0: #{tpu_custom_call.1}
  #allocation0 [shape = 'u32[]', space=smem, size = 0x4, offset = 0x4, fixed_abs, tag = 'smem constant byte address 0x4 - core index']
  #allocation1 [shape = 'u32[144,128]{1,0:T(1,128)}', space=vmem, size = 0x12000, scoped, tag = 'internal scratch']
  %s0 = inlined_call_operand.hbm [shape: f32[6,48], index: 0, kind: input, shape index: {}]
  %s1 = inlined_call_operand.hbm [shape: f32[48,128], index: 1, kind: input, shape index: {}]
  %s2 = inlined_call_operand.vmem [shape: f32[1,128], index: 2, kind: input, shape index: {}]
  %s3 = inlined_call_operand.hbm [shape: f32[128,128], index: 3, kind: input, shape index: {}]
  %s4 = inlined_call_operand.vmem [shape: f32[1,128], index: 4, kind: input, shape index: {}]
  %s5 = inlined_call_operand.hbm [shape: f32[128,128], index: 5, kind: input, shape index: {}]
  %s6 = inlined_call_operand.vmem [shape: f32[1,128], index: 6, kind: input, shape index: {}]
  %s7 = inlined_call_operand.hbm [shape: f32[6,128], index: 7, kind: output, shape index: {0}]
  %s8 = inlined_call_operand.hbm [shape: f32[6,128], index: 8, kind: output, shape index: {1}]
  %9 = xla_tuple %s7, %s8
  %s10 = sld [smem:[#allocation0]]
  $region62: #{tpu_custom_call.1} parent=0
    _
  %s12 = ssub.s32 1, %s10
  %s13 = scalar_select 0, %s12, %s10
  $region1: #{tpu_custom_call.1} parent=0
    #allocation2 [shape = 'u8[4096]{0}', space=vmem, size = 0x1000, scoped, tag = 'input window, operand 0, single buffered']
    #allocation3 [shape = 's32[1]{0}', space=sflag, size = 0x4, scoped, tag = 'scoped memory for tpu_custom_call.1']
    #allocation4 [shape = 's32[1]{0}', space=sflag, size = 0x4, scoped, tag = 'scoped memory for tpu_custom_call.1']
    #allocation5 [shape = 'u8[24576]{0}', space=vmem, size = 0x6000, scoped, tag = 'input window, operand 1, single buffered']
    #allocation6 [shape = 's32[1]{0}', space=sflag, size = 0x4, scoped, tag = 'scoped memory for tpu_custom_call.1']
    #allocation7 [shape = 'u8[65536]{0}', space=vmem, size = 0x10000, scoped, tag = 'input window, operand 3, single buffered']
    #allocation8 [shape = 'u8[65536]{0}', space=vmem, size = 0x10000, scoped, tag = 'input window, operand 5, single buffered']
    #allocation9 [shape = 's32[1]{0}', space=sflag, size = 0x4, scoped, tag = 'scoped memory for tpu_custom_call.1']
    #allocation10 [shape = 'u8[4096]{0}', space=vmem, size = 0x1000, scoped, tag = 'output window, operand 0, single buffered']
    #allocation11 [shape = 'u8[4096]{0}', space=vmem, size = 0x1000, scoped, tag = 'output window, operand 1, single buffered']
    #allocation12 [shape = 's32[1]{0}', space=sflag, size = 0x4, scoped, tag = 'scoped memory for tpu_custom_call.1']
    %14 = vsyncpa [#allocation3], 0
    %15 = vsyncpa [#allocation6], 0
    %16 = vsyncpa [#allocation9], 0
    %17 = vsyncpa [#allocation4], 0
    %18 = vsyncpa [#allocation12], 0
    // Predicated region
    $region2: #{tpu_custom_call.1} parent=1 // pred_check
      _
    $region3: #{tpu_custom_call.1} parent=1 // pred_check_branch
      %20 = sbr.rel (0) target = $region5
    $region4: #{tpu_custom_call.1} parent=1 // pred_region
      %s22 = ssub.s32 128, 128
      %23 = vsyncadd [#allocation3], %s22
      %s25 = sshll.u32 [#allocation2], 4
      %s26 = int_to_ptr.vmem [resolvable:$true] %s25
      %28 = dma.hbm_to_vmem [thread:$0]  %s0, 128, %s26, [#allocation3]
    $region5: #{tpu_custom_call.1} parent=1 // pred_fallthru
      _
    // Predicated region
    $region6: #{tpu_custom_call.1} parent=1 // pred_check
      _
    $region7: #{tpu_custom_call.1} parent=1 // pred_check_branch
      %30 = sbr.rel (0) target = $region9
    $region8: #{tpu_custom_call.1} parent=1 // pred_region
      %s32 = ssub.s32 768, 768
      %33 = vsyncadd [#allocation6], %s32
      %s34 = sshll.u32 [#allocation5], 4
      %s35 = int_to_ptr.vmem [resolvable:$true] %s34
      %40 = dma.hbm_to_vmem [thread:$0]  %s1, 768, %s35, [#allocation6], 128, 128, 8
    $region9: #{tpu_custom_call.1} parent=1 // pred_fallthru
      _
    // Predicated region
    $region10: #{tpu_custom_call.1} parent=1 // pred_check
      _
    $region11: #{tpu_custom_call.1} parent=1 // pred_check_branch
      %42 = sbr.rel (0) target = $region13
    $region12: #{tpu_custom_call.1} parent=1 // pred_region
      _
    $region13: #{tpu_custom_call.1} parent=1 // pred_fallthru
      _
    // Predicated region
    $region14: #{tpu_custom_call.1} parent=1 // pred_check
      _
    $region15: #{tpu_custom_call.1} parent=1 // pred_check_branch
      %44 = sbr.rel (0) target = $region17
    $region16: #{tpu_custom_call.1} parent=1 // pred_region
      %s46 = ssub.s32 2048, 2048
      %47 = vsyncadd [#allocation6], %s46
      %s48 = sshll.u32 [#allocation7], 4
      %s49 = int_to_ptr.vmem [resolvable:$true] %s48
      %54 = dma.hbm_to_vmem [thread:$0]  %s3, 2048, %s49, [#allocation6], 128, 128, 8
    $region17: #{tpu_custom_call.1} parent=1 // pred_fallthru
      _
    // Predicated region
    $region18: #{tpu_custom_call.1} parent=1 // pred_check
      _
    $region19: #{tpu_custom_call.1} parent=1 // pred_check_branch
      %56 = sbr.rel (0) target = $region21
    $region20: #{tpu_custom_call.1} parent=1 // pred_region
      _
    $region21: #{tpu_custom_call.1} parent=1 // pred_fallthru
      _
    // Predicated region
    $region22: #{tpu_custom_call.1} parent=1 // pred_check
      _
    $region23: #{tpu_custom_call.1} parent=1 // pred_check_branch
      %58 = sbr.rel (0) target = $region25
    $region24: #{tpu_custom_call.1} parent=1 // pred_region
      %s60 = ssub.s32 2048, 2048
      %61 = vsyncadd [#allocation9], %s60
      %s62 = sshll.u32 [#allocation8], 4
      %s63 = int_to_ptr.vmem [resolvable:$true] %s62
      %68 = dma.hbm_to_vmem [thread:$0]  %s5, 2048, %s63, [#allocation9], 128, 128, 8
    $region25: #{tpu_custom_call.1} parent=1 // pred_fallthru
      _
    // Predicated region
    $region26: #{tpu_custom_call.1} parent=1 // pred_check
      _
    $region27: #{tpu_custom_call.1} parent=1 // pred_check_branch
      %70 = sbr.rel (0) target = $region29
    $region28: #{tpu_custom_call.1} parent=1 // pred_region
      _
    $region29: #{tpu_custom_call.1} parent=1 // pred_fallthru
      _
    // Predicated region
    $region30: #{tpu_custom_call.1} parent=1 // pred_check
      _
    $region31: #{tpu_custom_call.1} parent=1 // pred_check_branch
      %72 = sbr.rel (0) target = $region33
    $region32: #{tpu_custom_call.1} parent=1 // pred_region
      %73 = dma.done [#allocation3], 128
    $region33: #{tpu_custom_call.1} parent=1 // pred_fallthru
      _
    // Predicated region
    $region34: #{tpu_custom_call.1} parent=1 // pred_check
      _
    $region35: #{tpu_custom_call.1} parent=1 // pred_check_branch
      %75 = sbr.rel (0) target = $region37
    $region36: #{tpu_custom_call.1} parent=1 // pred_region
      %76 = dma.done [#allocation6], 768
    $region37: #{tpu_custom_call.1} parent=1 // pred_fallthru
      _
    // Predicated region
    $region38: #{tpu_custom_call.1} parent=1 // pred_check
      _
    $region39: #{tpu_custom_call.1} parent=1 // pred_check_branch
      %78 = sbr.rel (0) target = $region41
    $region40: #{tpu_custom_call.1} parent=1 // pred_region
      %79 = dma.done [#allocation6], 2048
    $region41: #{tpu_custom_call.1} parent=1 // pred_fallthru
      _
    // Predicated region
    $region42: #{tpu_custom_call.1} parent=1 // pred_check
      _
    $region43: #{tpu_custom_call.1} parent=1 // pred_check_branch
      %81 = sbr.rel (0) target = $region45
    $region44: #{tpu_custom_call.1} parent=1 // pred_region
      %82 = dma.done [#allocation9], 2048
    $region45: #{tpu_custom_call.1} parent=1 // pred_fallthru
      _
    %v83 = vld [vmem:[#allocation2] sm:$0xff]
    %v84 = vld [vmem:[#allocation5] sm:$0xff]
    %v85 = vld [vmem:[#allocation5 + $0x8] sm:$0xff]
    %v86 = vld [vmem:[#allocation5 + $0x10] sm:$0xff]
    %v87 = vld [vmem:[#allocation5 + $0x18] sm:$0xff]
    %v88 = vld [vmem:[#allocation5 + $0x20] sm:$0xff]
    %v89 = vld [vmem:[#allocation5 + $0x28] sm:$0xff]
    %v90 = vld [vmem:[%s2] sm:$0x1]
    %v92 = vlaneseq
    %v93 = vshrl.u32 %v92, 7
    %v94 = vsub.s32 0, %v93
    %v95 = vrot.slane %v90, %v94
    %vm97 = vcmask 392192
    %v99 = vsel %vm97, %v83, 0
    %101 = vmatprep.subr.mxu0 0.0
    %102 = vmatpush1.msra.mxu0 0.0
    %103 = vmatprep.subr.mxu0 0.0
    %104 = vmatpush1.msra.mxu0 0.0
    %105 = vmatprep.subr.mxu0 0.0
    %106 = vmatpush1.msra.mxu0 0.0
    %107 = vmatprep.subr.mxu0 0.0
    %108 = vmatpush1.msra.mxu0 0.0
    %109 = vmatprep.subr.mxu0 0.0
    %110 = vmatpush1.msra.mxu0 0.0
    %111 = vmatprep.subr.mxu0 0.0
    %112 = vmatpush1.msra.mxu0 0.0
    %113 = vmatprep.subr.mxu0 0.0
    %114 = vmatpush1.msra.mxu0 0.0
    %115 = vmatprep.subr.mxu0 0.0
    %116 = vmatpush1.msra.mxu0 0.0
    %117 = vmatprep.subr.mxu0 0.0
    %118 = vmatpush1.msra.mxu0 0.0
    %119 = vmatprep.subr.mxu0 0.0
    %120 = vmatpush1.msra.mxu0 0.0
    %121 = vmatprep.subr.mxu0 0.0
    %122 = vmatpush1.msra.mxu0 %v89
    %123 = vmatprep.subr.mxu0 0.0
    %124 = vmatpush1.msra.mxu0 %v88
    %125 = vmatprep.subr.mxu0 0.0
    %126 = vmatpush1.msra.mxu0 %v87
    %127 = vmatprep.subr.mxu0 0.0
    %128 = vmatpush1.msra.mxu0 %v86
    %129 = vmatprep.subr.mxu0 0.0
    %130 = vmatpush1.msra.mxu0 %v85
    %131 = vmatprep.subr.mxu0 0.0
    %132 = vmatpush1.msra.mxu0 %v84
    %133 = vmatprep.subr.mxu0 0.0
    %134 = vmatpush2.msra.mxu0 0.0
    %135 = vmatprep.subr.mxu0 0.0
    %136 = vmatpush2.msra.mxu0 0.0
    %137 = vmatprep.subr.mxu0 0.0
    %138 = vmatpush2.msra.mxu0 0.0
    %139 = vmatprep.subr.mxu0 0.0
    %140 = vmatpush2.msra.mxu0 0.0
    %141 = vmatprep.subr.mxu0 0.0
    %142 = vmatpush2.msra.mxu0 0.0
    %143 = vmatprep.subr.mxu0 0.0
    %144 = vmatpush2.msra.mxu0 0.0
    %145 = vmatprep.subr.mxu0 0.0
    %146 = vmatpush2.msra.mxu0 0.0
    %147 = vmatprep.subr.mxu0 0.0
    %148 = vmatpush2.msra.mxu0 0.0
    %149 = vmatprep.subr.mxu0 0.0
    %150 = vmatpush2.msra.mxu0 0.0
    %151 = vmatprep.subr.mxu0 0.0
    %152 = vmatpush2.msra.mxu0 0.0
    %153 = vmatprep.subr.mxu0 0.0
    %154 = vmatpush2.msra.mxu0 0.0
    %155 = vmatprep.subr.mxu0 0.0
    %156 = vmatpush2.msra.mxu0 0.0
    %157 = vmatprep.subr.mxu0 0.0
    %158 = vmatpush2.msra.mxu0 0.0
    %159 = vmatprep.subr.mxu0 0.0
    %160 = vmatpush2.msra.mxu0 0.0
    %161 = vmatprep.subr.mxu0 0.0
    %162 = vmatpush2.msra.mxu0 0.0
    %163 = vmatprep.subr.mxu0 0.0
    %164 = vmatpush2.msra.mxu0 0.0
    %165 = vmatprep.mubr.f32.mxu0 0.0
    %166 = vmatmul.mubr.f32.gmra.mxu0 %v99
    %v167 = vpop.f32.mrf.mxu0
    %v168 = vadd.f32 %v95, %v167
    %v169 = vpop.f32.mrf.mxu0
    %170 = vdwg.mxu0
    %v171 = vmax.f32 %v168, 0.0
    %v172 = vld [vmem:[#allocation7] sm:$0xff]
    %v173 = vld [vmem:[#allocation7 + $0x8] sm:$0xff]
    %v174 = vld [vmem:[#allocation7 + $0x10] sm:$0xff]
    %v175 = vld [vmem:[#allocation7 + $0x18] sm:$0xff]
    %v176 = vld [vmem:[#allocation7 + $0x20] sm:$0xff]
    %v177 = vld [vmem:[#allocation7 + $0x28] sm:$0xff]
    %v178 = vld [vmem:[#allocation7 + $0x30] sm:$0xff]
    %v179 = vld [vmem:[#allocation7 + $0x38] sm:$0xff]
    %v180 = vld [vmem:[#allocation7 + $0x40] sm:$0xff]
    %v181 = vld [vmem:[#allocation7 + $0x48] sm:$0xff]
    %v182 = vld [vmem:[#allocation7 + $0x50] sm:$0xff]
    %v183 = vld [vmem:[#allocation7 + $0x58] sm:$0xff]
    %v184 = vld [vmem:[#allocation7 + $0x60] sm:$0xff]
    %v185 = vld [vmem:[#allocation7 + $0x68] sm:$0xff]
    %v186 = vld [vmem:[#allocation7 + $0x70] sm:$0xff]
    %v187 = vld [vmem:[#allocation7 + $0x78] sm:$0xff]
    %v188 = vld [vmem:[%s4] sm:$0x1]
    %v190 = vlaneseq
    %v191 = vshrl.u32 %v190, 7
    %v192 = vsub.s32 0, %v191
    %v193 = vrot.slane %v188, %v192
    %195 = vmatprep.subr.mxu0 0.0
    %196 = vmatpush1.msra.mxu0 %v187
    %197 = vmatprep.subr.mxu0 0.0
    %198 = vmatpush1.msra.mxu0 %v186
    %199 = vmatprep.subr.mxu0 0.0
    %200 = vmatpush1.msra.mxu0 %v185
    %201 = vmatprep.subr.mxu0 0.0
    %202 = vmatpush1.msra.mxu0 %v184
    %203 = vmatprep.subr.mxu0 0.0
    %204 = vmatpush1.msra.mxu0 %v183
    %205 = vmatprep.subr.mxu0 0.0
    %206 = vmatpush1.msra.mxu0 %v182
    %207 = vmatprep.subr.mxu0 0.0
    %208 = vmatpush1.msra.mxu0 %v181
    %209 = vmatprep.subr.mxu0 0.0
    %210 = vmatpush1.msra.mxu0 %v180
    %211 = vmatprep.subr.mxu0 0.0
    %212 = vmatpush1.msra.mxu0 %v179
    %213 = vmatprep.subr.mxu0 0.0
    %214 = vmatpush1.msra.mxu0 %v178
    %215 = vmatprep.subr.mxu0 0.0
    %216 = vmatpush1.msra.mxu0 %v177
    %217 = vmatprep.subr.mxu0 0.0
    %218 = vmatpush1.msra.mxu0 %v176
    %219 = vmatprep.subr.mxu0 0.0
    %220 = vmatpush1.msra.mxu0 %v175
    %221 = vmatprep.subr.mxu0 0.0
    %222 = vmatpush1.msra.mxu0 %v174
    %223 = vmatprep.subr.mxu0 0.0
    %224 = vmatpush1.msra.mxu0 %v173
    %225 = vmatprep.subr.mxu0 0.0
    %226 = vmatpush1.msra.mxu0 %v172
    %227 = vmatprep.subr.mxu0 0.0
    %228 = vmatpush2.msra.mxu0 0.0
    %229 = vmatprep.subr.mxu0 0.0
    %230 = vmatpush2.msra.mxu0 0.0
    %231 = vmatprep.subr.mxu0 0.0
    %232 = vmatpush2.msra.mxu0 0.0
    %233 = vmatprep.subr.mxu0 0.0
    %234 = vmatpush2.msra.mxu0 0.0
    %235 = vmatprep.subr.mxu0 0.0
    %236 = vmatpush2.msra.mxu0 0.0
    %237 = vmatprep.subr.mxu0 0.0
    %238 = vmatpush2.msra.mxu0 0.0
    %239 = vmatprep.subr.mxu0 0.0
    %240 = vmatpush2.msra.mxu0 0.0
    %241 = vmatprep.subr.mxu0 0.0
    %242 = vmatpush2.msra.mxu0 0.0
    %243 = vmatprep.subr.mxu0 0.0
    %244 = vmatpush2.msra.mxu0 0.0
    %245 = vmatprep.subr.mxu0 0.0
    %246 = vmatpush2.msra.mxu0 0.0
    %247 = vmatprep.subr.mxu0 0.0
    %248 = vmatpush2.msra.mxu0 0.0
    %249 = vmatprep.subr.mxu0 0.0
    %250 = vmatpush2.msra.mxu0 0.0
    %251 = vmatprep.subr.mxu0 0.0
    %252 = vmatpush2.msra.mxu0 0.0
    %253 = vmatprep.subr.mxu0 0.0
    %254 = vmatpush2.msra.mxu0 0.0
    %255 = vmatprep.subr.mxu0 0.0
    %256 = vmatpush2.msra.mxu0 0.0
    %257 = vmatprep.subr.mxu0 0.0
    %258 = vmatpush2.msra.mxu0 0.0
    %259 = vmatprep.mubr.f32.mxu0 0.0
    %260 = vmatmul.mubr.f32.gmra.mxu0 %v171
    %v261 = vpop.f32.mrf.mxu0
    %v262 = vadd.f32 %v193, %v261
    %v263 = vpop.f32.mrf.mxu0
    %264 = vdwg.mxu0
    %v265 = vmax.f32 %v262, 0.0
    %v266 = vld [vmem:[#allocation8] sm:$0xff]
    %v267 = vld [vmem:[#allocation8 + $0x8] sm:$0xff]
    %v268 = vld [vmem:[#allocation8 + $0x10] sm:$0xff]
    %v269 = vld [vmem:[#allocation8 + $0x18] sm:$0xff]
    %v270 = vld [vmem:[#allocation8 + $0x20] sm:$0xff]
    %v271 = vld [vmem:[#allocation8 + $0x28] sm:$0xff]
    %v272 = vld [vmem:[#allocation8 + $0x30] sm:$0xff]
    %v273 = vld [vmem:[#allocation8 + $0x38] sm:$0xff]
    %v274 = vld [vmem:[#allocation8 + $0x40] sm:$0xff]
    %v275 = vld [vmem:[#allocation8 + $0x48] sm:$0xff]
    %v276 = vld [vmem:[#allocation8 + $0x50] sm:$0xff]
    %v277 = vld [vmem:[#allocation8 + $0x58] sm:$0xff]
    %v278 = vld [vmem:[#allocation8 + $0x60] sm:$0xff]
    %v279 = vld [vmem:[#allocation8 + $0x68] sm:$0xff]
    %v280 = vld [vmem:[#allocation8 + $0x70] sm:$0xff]
    %v281 = vld [vmem:[#allocation8 + $0x78] sm:$0xff]
    %v282 = vld [vmem:[%s6] sm:$0x1]
    %v284 = vlaneseq
    %v285 = vshrl.u32 %v284, 7
    %v286 = vsub.s32 0, %v285
    %v287 = vrot.slane %v282, %v286
    %289 = vmatprep.subr.mxu0 0.0
    %290 = vmatpush1.msra.mxu0 %v281
    %291 = vmatprep.subr.mxu0 0.0
    %292 = vmatpush1.msra.mxu0 %v280
    %293 = vmatprep.subr.mxu0 0.0
    %294 = vmatpush1.msra.mxu0 %v279
    %295 = vmatprep.subr.mxu0 0.0
    %296 = vmatpush1.msra.mxu0 %v278
    %297 = vmatprep.subr.mxu0 0.0
    %298 = vmatpush1.msra.mxu0 %v277
    %299 = vmatprep.subr.mxu0 0.0
    %300 = vmatpush1.msra.mxu0 %v276
    %301 = vmatprep.subr.mxu0 0.0
    %302 = vmatpush1.msra.mxu0 %v275
    %303 = vmatprep.subr.mxu0 0.0
    %304 = vmatpush1.msra.mxu0 %v274
    %305 = vmatprep.subr.mxu0 0.0
    %306 = vmatpush1.msra.mxu0 %v273
    %307 = vmatprep.subr.mxu0 0.0
    %308 = vmatpush1.msra.mxu0 %v272
    %309 = vmatprep.subr.mxu0 0.0
    %310 = vmatpush1.msra.mxu0 %v271
    %311 = vmatprep.subr.mxu0 0.0
    %312 = vmatpush1.msra.mxu0 %v270
    %313 = vmatprep.subr.mxu0 0.0
    %314 = vmatpush1.msra.mxu0 %v269
    %315 = vmatprep.subr.mxu0 0.0
    %316 = vmatpush1.msra.mxu0 %v268
    %317 = vmatprep.subr.mxu0 0.0
    %318 = vmatpush1.msra.mxu0 %v267
    %319 = vmatprep.subr.mxu0 0.0
    %320 = vmatpush1.msra.mxu0 %v266
    %321 = vmatprep.subr.mxu0 0.0
    %322 = vmatpush2.msra.mxu0 0.0
    %323 = vmatprep.subr.mxu0 0.0
    %324 = vmatpush2.msra.mxu0 0.0
    %325 = vmatprep.subr.mxu0 0.0
    %326 = vmatpush2.msra.mxu0 0.0
    %327 = vmatprep.subr.mxu0 0.0
    %328 = vmatpush2.msra.mxu0 0.0
    %329 = vmatprep.subr.mxu0 0.0
    %330 = vmatpush2.msra.mxu0 0.0
    %331 = vmatprep.subr.mxu0 0.0
    %332 = vmatpush2.msra.mxu0 0.0
    %333 = vmatprep.subr.mxu0 0.0
    %334 = vmatpush2.msra.mxu0 0.0
    %335 = vmatprep.subr.mxu0 0.0
    %336 = vmatpush2.msra.mxu0 0.0
    %337 = vmatprep.subr.mxu0 0.0
    %338 = vmatpush2.msra.mxu0 0.0
    %339 = vmatprep.subr.mxu0 0.0
    %340 = vmatpush2.msra.mxu0 0.0
    %341 = vmatprep.subr.mxu0 0.0
    %342 = vmatpush2.msra.mxu0 0.0
    %343 = vmatprep.subr.mxu0 0.0
    %344 = vmatpush2.msra.mxu0 0.0
    %345 = vmatprep.subr.mxu0 0.0
    %346 = vmatpush2.msra.mxu0 0.0
    %347 = vmatprep.subr.mxu0 0.0
    %348 = vmatpush2.msra.mxu0 0.0
    %349 = vmatprep.subr.mxu0 0.0
    %350 = vmatpush2.msra.mxu0 0.0
    %351 = vmatprep.subr.mxu0 0.0
    %352 = vmatpush2.msra.mxu0 0.0
    %353 = vmatprep.mubr.f32.mxu0 0.0
    %354 = vmatmul.mubr.f32.gmra.mxu0 %v265
    %v355 = vpop.f32.mrf.mxu0
    %v356 = vadd.f32 %v287, %v355
    %v357 = vpop.f32.mrf.mxu0
    %358 = vdwg.mxu0
    %359 = vmax.xlane.f32.xlu0 %v356
    %v360 = vpop.xlane.xlu0 %359
    %v361 = vsub.f32 %v356, %v360
    %v362 = vmul.f32 %v361, 1.442695
    %v363 = vpow.pop %v362
    %364 = vadd.xlane.f32.xlu0 %v363
    %v365 = vpop.xlane.xlu0 %364
    %v366 = vrcp.pop %v365
    %v367 = vmul.f32 %v363, %v366
    %368 = vst [vmem:[#allocation10] sm:$0xff] %v367
    %369 = vst [vmem:[#allocation11] sm:$0xff] %v265
    // Predicated region
    $region46: #{tpu_custom_call.1} parent=1 // pred_check
      _
    $region47: #{tpu_custom_call.1} parent=1 // pred_check_branch
      %371 = sbr.rel (0) target = $region49
    $region48: #{tpu_custom_call.1} parent=1 // pred_region
      %s373 = ssub.s32 128, 128
      %374 = vsyncadd [#allocation4], %s373
      %s376 = sshll.u32 [#allocation10], 4
      %s377 = int_to_ptr.vmem [resolvable:$true] %s376
      %379 = dma.vmem_to_hbm [thread:$0]  %s377, 128, %s7, [#allocation4]
    $region49: #{tpu_custom_call.1} parent=1 // pred_fallthru
      _
    // Predicated region
    $region50: #{tpu_custom_call.1} parent=1 // pred_check
      _
    $region51: #{tpu_custom_call.1} parent=1 // pred_check_branch
      %381 = sbr.rel (0) target = $region53
    $region52: #{tpu_custom_call.1} parent=1 // pred_region
      %s383 = ssub.s32 128, 128
      %384 = vsyncadd [#allocation12], %s383
      %s386 = sshll.u32 [#allocation11], 4
      %s387 = int_to_ptr.vmem [resolvable:$true] %s386
      %389 = dma.vmem_to_hbm [thread:$0]  %s387, 128, %s8, [#allocation12]
    $region53: #{tpu_custom_call.1} parent=1 // pred_fallthru
      _
    // Predicated region
    $region54: #{tpu_custom_call.1} parent=1 // pred_check
      _
    $region55: #{tpu_custom_call.1} parent=1 // pred_check_branch
      %391 = sbr.rel (0) target = $region57
    $region56: #{tpu_custom_call.1} parent=1 // pred_region
      %392 = dma.done [#allocation4], 128
    $region57: #{tpu_custom_call.1} parent=1 // pred_fallthru
      _
    // Predicated region
    $region58: #{tpu_custom_call.1} parent=1 // pred_check
      _
    $region59: #{tpu_custom_call.1} parent=1 // pred_check_branch
      %394 = sbr.rel (0) target = $region61
    $region60: #{tpu_custom_call.1} parent=1 // pred_region
      %395 = dma.done [#allocation12], 128
    $region61: #{tpu_custom_call.1} parent=1 // pred_fallthru
      _
    %396 = vsyncpa [#allocation3], 1
    %397 = vsyncpa [#allocation6], 1
    %398 = vsyncpa [#allocation9], 1
    %399 = vsyncpa [#allocation4], 1
    %400 = vsyncpa [#allocation12], 1

</llo_original>
